<compile_context>
chip_gen: v6e
topology: v6e:2x2x1
jax: 0.10.0
libtpu: 0.0.40
codegen_flags: <defaults>
</compile_context>

<pallas_src>
import jax
import jax.numpy as jnp
from jax.experimental import pallas as pl
from jax.experimental.pallas import tpu as pltpu

# Problem sizes (small, consistent with the module: in_ch=4 -> out_ch=8, 16x16 spatial)
N, H, W = 2, 16, 16
C_IN, C_OUT = 4, 8
K = 3                        # kernel size
KKC = K * K * C_IN           # 36   (im2col contraction depth)
NHW = N * H * W              # 512  (rows of the conv output)
EPS = 1e-5                   # BatchNorm2d default eps


def convblock_kernel(wT_ref, patT_ref, gamma_ref, beta_ref, out_ref):
    """conv (single GEMM) + training-mode BatchNorm + ReLU, all in VMEM.

    wT_ref:    (C_OUT, KKC)   conv weights, transposed           (8, 36)
    patT_ref:  (KKC, NHW)     im2col patches, transposed         (36, 512)
    gamma_ref: (C_OUT, 1)     BN weight
    beta_ref:  (C_OUT, 1)     BN bias
    out_ref:   (C_OUT, NHW)   lane-dense output slab             (8, 512)
    """
    # One MXU push: (8, 36) x (36, 512) -> (8, 512) f32.
    conv = jnp.dot(wT_ref[...], patT_ref[...], preferred_element_type=jnp.float32)

    # Per-channel batch statistics over the lane axis (N*H*W elements/channel).
    inv_cnt = jnp.float32(1.0 / NHW)
    mean = jnp.sum(conv, axis=1, keepdims=True) * inv_cnt                 # (C_OUT, 1)
    centered = conv - mean
    var = jnp.sum(centered * centered, axis=1, keepdims=True) * inv_cnt   # biased var
    scale = gamma_ref[...] * jax.lax.rsqrt(var + EPS)                     # (C_OUT, 1)

    # BN + ReLU. Conv bias omitted: it is cancelled by the mean subtraction above.
    out_ref[...] = jnp.maximum(centered * scale + beta_ref[...], 0.0)


def convblock(x_nchw, w_oihw, b, gamma, beta):
    """Wrapper: layout glue (im2col / transposes) in plain JAX, compute in Pallas.

    `b` (the conv bias) is accepted for API parity but intentionally unused:
    under training-mode BatchNorm a per-channel constant bias is cancelled by
    the batch-mean subtraction, so it has no effect on the output.
    """
    del b
    x_nhwc = jnp.transpose(x_nchw, (0, 2, 3, 1)).astype(jnp.float32)
    xp = jnp.pad(x_nhwc, ((0, 0), (1, 1), (1, 1), (0, 0)))                # padding=1

    # im2col: rows ordered (n, h, w), columns ordered (kh, kw, c_in).
    cols = [xp[:, kh:kh + H, kw:kw + W, :].reshape(NHW, C_IN)
            for kh in range(K) for kw in range(K)]
    patches_T = jnp.concatenate(cols, axis=1).T                           # (KKC, NHW)

    # (O, I, KH, KW) -> (KH, KW, I, O) -> (KKC, O) -> (O, KKC); matches column order.
    w_T = jnp.transpose(w_oihw, (2, 3, 1, 0)).reshape(KKC, C_OUT).T.astype(jnp.float32)

    g2 = gamma.reshape(C_OUT, 1).astype(jnp.float32)
    bt2 = beta.reshape(C_OUT, 1).astype(jnp.float32)

    grid_spec = pltpu.PrefetchScalarGridSpec(
        num_scalar_prefetch=0,
        grid=(1,),
        in_specs=[
            pl.BlockSpec((C_OUT, KKC), lambda i: (0, 0)),
            pl.BlockSpec((KKC, NHW), lambda i: (0, 0)),
            pl.BlockSpec((C_OUT, 1), lambda i: (0, 0)),
            pl.BlockSpec((C_OUT, 1), lambda i: (0, 0)),
        ],
        out_specs=pl.BlockSpec((C_OUT, NHW), lambda i: (0, 0)),
    )

    out = pl.pallas_call(
        convblock_kernel,
        out_shape=jax.ShapeDtypeStruct((C_OUT, NHW), jnp.float32),
        grid_spec=grid_spec,
        compiler_params=pltpu.CompilerParams(dimension_semantics=("arbitrary",)),
    )(w_T, patches_T, g2, bt2)

    # (C_OUT, N*H*W) -> (N, C_OUT, H, W). Pure layout; done in XLA.
    return jnp.transpose(out.reshape(C_OUT, N, H, W), (1, 0, 2, 3))


def convblock_ref(x_nchw, w_oihw, b, gamma, beta):
    """Pure-JAX reference mirroring the PyTorch module (training-mode BN)."""
    y = jax.lax.conv_general_dilated(
        x_nchw, w_oihw, window_strides=(1, 1), padding=((1, 1), (1, 1)),
        dimension_numbers=("NCHW", "OIHW", "NCHW"))
    y = y + b[None, :, None, None]
    mean = jnp.mean(y, axis=(0, 2, 3), keepdims=True)
    var = jnp.var(y, axis=(0, 2, 3), keepdims=True)   # biased, as BN uses for normalization
    y = (y - mean) / jnp.sqrt(var + EPS) * gamma[None, :, None, None] + beta[None, :, None, None]
    return jnp.maximum(y, 0.0)


if __name__ == "__main__":
    key = jax.random.PRNGKey(0)
    k1, k2, k3, k4, k5 = jax.random.split(key, 5)

    # Deterministic synthetic params (shapes from nn.Conv2d(4, 8, 3, 1, 1) + BatchNorm2d(8))
    x = jax.random.normal(k1, (N, C_IN, H, W), jnp.float32)
    w = 0.1 * jax.random.normal(k2, (C_OUT, C_IN, K, K), jnp.float32)
    b = 0.1 * jax.random.normal(k3, (C_OUT,), jnp.float32)
    gamma = 1.0 + 0.1 * jax.random.normal(k4, (C_OUT,), jnp.float32)
    beta = 0.1 * jax.random.normal(k5, (C_OUT,), jnp.float32)

    out = convblock(x, w, b, gamma, beta)
    out = jax.block_until_ready(out)

    ref = convblock_ref(x, w, b, gamma, beta)
    assert out.shape == (N, C_OUT, H, W)
    assert jnp.allclose(out, ref, rtol=1e-3, atol=1e-3), "mismatch vs reference"

    print("KERNEL_OK")
</pallas_src>

<mosaic_0001>
module attributes {stable_mosaic.version = 11 : i64} {
  func.func @convblock_kernel(%arg0: i32, %arg1: memref<8x36xf32, #tpu.memory_space<vmem>>, %arg2: memref<36x512xf32, #tpu.memory_space<vmem>>, %arg3: memref<8x1xf32, #tpu.memory_space<vmem>>, %arg4: memref<8x1xf32, #tpu.memory_space<vmem>>, %arg5: memref<8x512xf32, #tpu.memory_space<vmem>>) attributes {dimension_semantics = [#tpu.dimension_semantics<arbitrary>], iteration_bounds = array<i64: 1>, scalar_prefetch = 0 : i64, scratch_operands = 0 : i64, tpu.core_type = #tpu.core_type<tc>, window_params = [{pipeline_mode = #tpu.pipeline_mode<synchronous>, transform_indices = @transform_0, window_bounds = array<i64: 8, 36>}, {pipeline_mode = #tpu.pipeline_mode<synchronous>, transform_indices = @transform_1, window_bounds = array<i64: 36, 512>}, {pipeline_mode = #tpu.pipeline_mode<synchronous>, transform_indices = @transform_2, window_bounds = array<i64: 8, 1>}, {pipeline_mode = #tpu.pipeline_mode<synchronous>, transform_indices = @transform_3, window_bounds = array<i64: 8, 1>}, {pipeline_mode = #tpu.pipeline_mode<synchronous>, transform_indices = @transform_4, window_bounds = array<i64: 8, 512>}]} {
    %c0 = arith.constant 0 : index
    %c0_0 = arith.constant 0 : index
    %0 = vector.load %arg1[%c0, %c0_0] : memref<8x36xf32, #tpu.memory_space<vmem>>, vector<8x36xf32>
    %c0_1 = arith.constant 0 : index
    %c0_2 = arith.constant 0 : index
    %1 = vector.load %arg2[%c0_1, %c0_2] : memref<36x512xf32, #tpu.memory_space<vmem>>, vector<36x512xf32>
    %cst = arith.constant dense<0.000000e+00> : vector<8x512xf32>
    %2 = tpu.matmul %0, %1, %cst {dimension_numbers = #tpu.dot_dimension_numbers<[1], [0], [0], [1], [0, 0, 1, 1], [], []>} : vector<8x36xf32>, vector<36x512xf32>, vector<8x512xf32> -> vector<8x512xf32>
    %cst_3 = arith.constant dense<0.000000e+00> : vector<8xf32>
    %3 = vector.multi_reduction <add>, %2, %cst_3 [1] : vector<8x512xf32> to vector<8xf32>
    %4 = vector.shape_cast %3 : vector<8xf32> to vector<8x1xf32>
    %cst_4 = arith.constant 0.001953125 : f32
    %5 = vector.broadcast %cst_4 : f32 to vector<8x1xf32>
    %6 = arith.mulf %4, %5 : vector<8x1xf32>
    %7 = vector.broadcast %6 : vector<8x1xf32> to vector<8x512xf32>
    %8 = arith.subf %2, %7 : vector<8x512xf32>
    %9 = arith.mulf %8, %8 : vector<8x512xf32>
    %cst_5 = arith.constant dense<0.000000e+00> : vector<8xf32>
    %10 = vector.multi_reduction <add>, %9, %cst_5 [1] : vector<8x512xf32> to vector<8xf32>
    %11 = vector.shape_cast %10 : vector<8xf32> to vector<8x1xf32>
    %cst_6 = arith.constant 0.001953125 : f32
    %12 = vector.broadcast %cst_6 : f32 to vector<8x1xf32>
    %13 = arith.mulf %11, %12 : vector<8x1xf32>
    %c0_7 = arith.constant 0 : index
    %c0_8 = arith.constant 0 : index
    %14 = vector.load %arg3[%c0_7, %c0_8] : memref<8x1xf32, #tpu.memory_space<vmem>>, vector<8x1xf32>
    %cst_9 = arith.constant 9.99999974E-6 : f32
    %15 = vector.broadcast %cst_9 : f32 to vector<8x1xf32>
    %16 = arith.addf %13, %15 : vector<8x1xf32>
    %17 = math.rsqrt %16 : vector<8x1xf32>
    %18 = arith.mulf %14, %17 : vector<8x1xf32>
    %19 = vector.broadcast %18 : vector<8x1xf32> to vector<8x512xf32>
    %20 = arith.mulf %8, %19 : vector<8x512xf32>
    %c0_10 = arith.constant 0 : index
    %c0_11 = arith.constant 0 : index
    %21 = vector.load %arg4[%c0_10, %c0_11] : memref<8x1xf32, #tpu.memory_space<vmem>>, vector<8x1xf32>
    %22 = vector.broadcast %21 : vector<8x1xf32> to vector<8x512xf32>
    %23 = arith.addf %20, %22 : vector<8x512xf32>
    %cst_12 = arith.constant 0.000000e+00 : f32
    %24 = vector.broadcast %cst_12 : f32 to vector<8x512xf32>
    %25 = arith.maximumf %23, %24 : vector<8x512xf32>
    %c0_13 = arith.constant 0 : index
    %c0_14 = arith.constant 0 : index
    %26 = vector.load %arg5[%c0_13, %c0_14] : memref<8x512xf32, #tpu.memory_space<vmem>>, vector<8x512xf32>
    tpu.vector_store %arg5[%c0_13, %c0_14], %25 {strides = array<i32>} : memref<8x512xf32, #tpu.memory_space<vmem>>, vector<8x512xf32>,
    return
  }
  func.func @transform_0(%arg0: i32) -> (i32, i32) {
    %c0_i32 = arith.constant 0 : i32
    %c0_i32_0 = arith.constant 0 : i32
    %c0_i32_1 = arith.constant 0 : i32
    return %c0_i32, %c0_i32_0 : i32, i32
  }
  func.func @transform_1(%arg0: i32) -> (i32, i32) {
    %c0_i32 = arith.constant 0 : i32
    %c0_i32_0 = arith.constant 0 : i32
    %c0_i32_1 = arith.constant 0 : i32
    return %c0_i32, %c0_i32_0 : i32, i32
  }
  func.func @transform_2(%arg0: i32) -> (i32, i32) {
    %c0_i32 = arith.constant 0 : i32
    %c0_i32_0 = arith.constant 0 : i32
    %c0_i32_1 = arith.constant 0 : i32
    return %c0_i32, %c0_i32_0 : i32, i32
  }
  func.func @transform_3(%arg0: i32) -> (i32, i32) {
    %c0_i32 = arith.constant 0 : i32
    %c0_i32_0 = arith.constant 0 : i32
    %c0_i32_1 = arith.constant 0 : i32
    return %c0_i32, %c0_i32_0 : i32, i32
  }
  func.func @transform_4(%arg0: i32) -> (i32, i32) {
    %c0_i32 = arith.constant 0 : i32
    %c0_i32_0 = arith.constant 0 : i32
    %c0_i32_1 = arith.constant 0 : i32
    return %c0_i32, %c0_i32_0 : i32, i32
  }
}

</mosaic_0001>

<llo_original>
// kernel: tpu_custom_call.1
$region0: #{tpu_custom_call.1}
  #allocation0 [shape = 'u32[]', space=smem, size = 0x4, offset = 0x4, fixed_abs, tag = 'smem constant byte address 0x4 - core index']
  #allocation1 [shape = 'u32[144,128]{1,0:T(1,128)}', space=vmem, size = 0x12000, scoped, tag = 'internal scratch']
  %s0 = inlined_call_operand.vmem [shape: f32[8,36], index: 0, kind: input, shape index: {}]
  %s1 = inlined_call_operand.hbm [shape: f32[36,512], index: 1, kind: input, shape index: {}]
  %s2 = inlined_call_operand.vmem [shape: f32[8,1], index: 2, kind: input, shape index: {}]
  %s3 = inlined_call_operand.vmem [shape: f32[8,1], index: 3, kind: input, shape index: {}]
  %s4 = inlined_call_operand.hbm [shape: f32[8,512], index: 4, kind: output, shape index: {}]
  %s5 = sld [smem:[#allocation0]]
  $region30: #{tpu_custom_call.1} parent=0
    _
  %s7 = ssub.s32 1, %s5
  %s8 = scalar_select 0, %s7, %s5
  $region1: #{tpu_custom_call.1} parent=0
    #allocation2 [shape = 'u8[81920]{0}', space=vmem, size = 0x14000, scoped, tag = 'input window, operand 1, single buffered']
    #allocation3 [shape = 's32[1]{0}', space=sflag, size = 0x4, scoped, tag = 'scoped memory for tpu_custom_call.1']
    #allocation4 [shape = 's32[1]{0}', space=sflag, size = 0x4, scoped, tag = 'scoped memory for tpu_custom_call.1']
    #allocation5 [shape = 'u8[16384]{0}', space=vmem, size = 0x4000, scoped, tag = 'output window, operand 0, single buffered']
    %9 = vsyncpa [#allocation3], 0
    %10 = vsyncpa [#allocation4], 0
    // Predicated region
    $region2: #{tpu_custom_call.1} parent=1 // pred_check
      _
    $region3: #{tpu_custom_call.1} parent=1 // pred_check_branch
      %12 = sbr.rel (0) target = $region5
    $region4: #{tpu_custom_call.1} parent=1 // pred_region
      _
    $region5: #{tpu_custom_call.1} parent=1 // pred_fallthru
      _
    // Predicated region
    $region6: #{tpu_custom_call.1} parent=1 // pred_check
      _
    $region7: #{tpu_custom_call.1} parent=1 // pred_check_branch
      %14 = sbr.rel (0) target = $region9
    $region8: #{tpu_custom_call.1} parent=1 // pred_region
      %s16 = ssub.s32 2560, 2560
      %17 = vsyncadd [#allocation3], %s16
      %s18 = sshll.u32 [#allocation2], 4
      %s19 = int_to_ptr.vmem [resolvable:$true] %s18
      %24 = dma.hbm_to_vmem [thread:$0]  %s1, 2560, %s19, [#allocation3], 512, 512, 32
    $region9: #{tpu_custom_call.1} parent=1 // pred_fallthru
      _
    // Predicated region
    $region10: #{tpu_custom_call.1} parent=1 // pred_check
      _
    $region11: #{tpu_custom_call.1} parent=1 // pred_check_branch
      %26 = sbr.rel (0) target = $region13
    $region12: #{tpu_custom_call.1} parent=1 // pred_region
      _
    $region13: #{tpu_custom_call.1} parent=1 // pred_fallthru
      _
    // Predicated region
    $region14: #{tpu_custom_call.1} parent=1 // pred_check
      _
    $region15: #{tpu_custom_call.1} parent=1 // pred_check_branch
      %28 = sbr.rel (0) target = $region17
    $region16: #{tpu_custom_call.1} parent=1 // pred_region
      _
    $region17: #{tpu_custom_call.1} parent=1 // pred_fallthru
      _
    // Predicated region
    $region18: #{tpu_custom_call.1} parent=1 // pred_check
      _
    $region19: #{tpu_custom_call.1} parent=1 // pred_check_branch
      %30 = sbr.rel (0) target = $region21
    $region20: #{tpu_custom_call.1} parent=1 // pred_region
      %31 = dma.done [#allocation3], 2560
    $region21: #{tpu_custom_call.1} parent=1 // pred_fallthru
      _
    %v32 = vld [vmem:[%s0] sm:$0xff]
    %v33 = vld [vmem:[#allocation2] sm:$0xff]
    %v34 = vld [vmem:[#allocation2 + $0x8] sm:$0xff]
    %v35 = vld [vmem:[#allocation2 + $0x10] sm:$0xff]
    %v36 = vld [vmem:[#allocation2 + $0x18] sm:$0xff]
    %v37 = vld [vmem:[#allocation2 + $0x20] sm:$0xff]
    %v38 = vld [vmem:[#allocation2 + $0x28] sm:$0xff]
    %v39 = vld [vmem:[#allocation2 + $0x30] sm:$0xff]
    %v40 = vld [vmem:[#allocation2 + $0x38] sm:$0xff]
    %v41 = vld [vmem:[#allocation2 + $0x40] sm:$0xff]
    %v42 = vld [vmem:[#allocation2 + $0x48] sm:$0xff]
    %v43 = vld [vmem:[#allocation2 + $0x50] sm:$0xff]
    %v44 = vld [vmem:[#allocation2 + $0x58] sm:$0xff]
    %v45 = vld [vmem:[#allocation2 + $0x60] sm:$0xff]
    %v46 = vld [vmem:[#allocation2 + $0x68] sm:$0xff]
    %v47 = vld [vmem:[#allocation2 + $0x70] sm:$0xff]
    %v48 = vld [vmem:[#allocation2 + $0x78] sm:$0xff]
    %v49 = vld [vmem:[#allocation2 + $0x80] sm:$0xf]
    %v50 = vld [vmem:[#allocation2 + $0x88] sm:$0xf]
    %v51 = vld [vmem:[#allocation2 + $0x90] sm:$0xf]
    %v52 = vld [vmem:[#allocation2 + $0x98] sm:$0xf]
    %vm53 = vcmask 293888
    %v55 = vsel %vm53, %v32, 0
    %vm57 = vcmask 1043456
    %v59 = vsel %vm57, %v49, 0
    %v62 = vsel %vm57, %v50, 0
    %v65 = vsel %vm57, %v51, 0
    %v68 = vsel %vm57, %v52, 0
    %70 = vmatprep.subr.mxu0 0.0
    %71 = vmatpush1.msra.mxu0 0.0
    %72 = vmatprep.subr.mxu0 0.0
    %73 = vmatpush1.msra.mxu0 0.0
    %74 = vmatprep.subr.mxu0 0.0
    %75 = vmatpush1.msra.mxu0 0.0
    %76 = vmatprep.subr.mxu0 0.0
    %77 = vmatpush1.msra.mxu0 0.0
    %78 = vmatprep.subr.mxu0 0.0
    %79 = vmatpush1.msra.mxu0 0.0
    %80 = vmatprep.subr.mxu0 0.0
    %81 = vmatpush1.msra.mxu0 0.0
    %82 = vmatprep.subr.mxu0 0.0
    %83 = vmatpush1.msra.mxu0 0.0
    %84 = vmatprep.subr.mxu0 0.0
    %85 = vmatpush1.msra.mxu0 0.0
    %86 = vmatprep.subr.mxu0 0.0
    %87 = vmatpush1.msra.mxu0 0.0
    %88 = vmatprep.subr.mxu0 0.0
    %89 = vmatpush1.msra.mxu0 0.0
    %90 = vmatprep.subr.mxu0 0.0
    %91 = vmatpush1.msra.mxu0 0.0
    %92 = vmatprep.subr.mxu0 %v62
    %93 = vmatpush1.msra.mxu0 %v59
    %94 = vmatprep.subr.mxu0 %v46
    %95 = vmatpush1.msra.mxu0 %v45
    %96 = vmatprep.subr.mxu0 %v42
    %97 = vmatpush1.msra.mxu0 %v41
    %98 = vmatprep.subr.mxu0 %v38
    %99 = vmatpush1.msra.mxu0 %v37
    %100 = vmatprep.subr.mxu0 %v34
    %101 = vmatpush1.msra.mxu0 %v33
    %102 = vmatprep.subr.mxu0 0.0
    %103 = vmatpush2.msra.mxu0 0.0
    %104 = vmatprep.subr.mxu0 0.0
    %105 = vmatpush2.msra.mxu0 0.0
    %106 = vmatprep.subr.mxu0 0.0
    %107 = vmatpush2.msra.mxu0 0.0
    %108 = vmatprep.subr.mxu0 0.0
    %109 = vmatpush2.msra.mxu0 0.0
    %110 = vmatprep.subr.mxu0 0.0
    %111 = vmatpush2.msra.mxu0 0.0
    %112 = vmatprep.subr.mxu0 0.0
    %113 = vmatpush2.msra.mxu0 0.0
    %114 = vmatprep.subr.mxu0 0.0
    %115 = vmatpush2.msra.mxu0 0.0
    %116 = vmatprep.subr.mxu0 0.0
    %117 = vmatpush2.msra.mxu0 0.0
    %118 = vmatprep.subr.mxu0 0.0
    %119 = vmatpush2.msra.mxu0 0.0
    %120 = vmatprep.subr.mxu0 0.0
    %121 = vmatpush2.msra.mxu0 0.0
    %122 = vmatprep.subr.mxu0 0.0
    %123 = vmatpush2.msra.mxu0 0.0
    %124 = vmatprep.subr.mxu0 0.0
    %125 = vmatpush2.msra.mxu0 0.0
    %126 = vmatprep.subr.mxu0 0.0
    %127 = vmatpush2.msra.mxu0 0.0
    %128 = vmatprep.subr.mxu0 0.0
    %129 = vmatpush2.msra.mxu0 0.0
    %130 = vmatprep.subr.mxu0 0.0
    %131 = vmatpush2.msra.mxu0 0.0
    %132 = vmatprep.subr.mxu0 0.0
    %133 = vmatpush2.msra.mxu0 0.0
    %134 = vmatprep.mubr.f32.mxu0 0.0
    %135 = vmatmul.mubr.f32.gmra.mxu0 %v55
    %v136 = vpop.f32.mrf.mxu0
    %v137 = vadd.f32 0.0, %v136
    %v138 = vpop.f32.mrf.mxu0
    %v139 = vadd.f32 0.0, %v138
    %140 = vdwg.mxu0
    %141 = vmatprep.subr.mxu0 0.0
    %142 = vmatpush1.msra.mxu0 0.0
    %143 = vmatprep.subr.mxu0 0.0
    %144 = vmatpush1.msra.mxu0 0.0
    %145 = vmatprep.subr.mxu0 0.0
    %146 = vmatpush1.msra.mxu0 0.0
    %147 = vmatprep.subr.mxu0 0.0
    %148 = vmatpush1.msra.mxu0 0.0
    %149 = vmatprep.subr.mxu0 0.0
    %150 = vmatpush1.msra.mxu0 0.0
    %151 = vmatprep.subr.mxu0 0.0
    %152 = vmatpush1.msra.mxu0 0.0
    %153 = vmatprep.subr.mxu0 0.0
    %154 = vmatpush1.msra.mxu0 0.0
    %155 = vmatprep.subr.mxu0 0.0
    %156 = vmatpush1.msra.mxu0 0.0
    %157 = vmatprep.subr.mxu0 0.0
    %158 = vmatpush1.msra.mxu0 0.0
    %159 = vmatprep.subr.mxu0 0.0
    %160 = vmatpush1.msra.mxu0 0.0
    %161 = vmatprep.subr.mxu0 0.0
    %162 = vmatpush1.msra.mxu0 0.0
    %163 = vmatprep.subr.mxu0 %v68
    %164 = vmatpush1.msra.mxu0 %v65
    %165 = vmatprep.subr.mxu0 %v48
    %166 = vmatpush1.msra.mxu0 %v47
    %167 = vmatprep.subr.mxu0 %v44
    %168 = vmatpush1.msra.mxu0 %v43
    %169 = vmatprep.subr.mxu0 %v40
    %170 = vmatpush1.msra.mxu0 %v39
    %171 = vmatprep.subr.mxu0 %v36
    %172 = vmatpush1.msra.mxu0 %v35
    %173 = vmatprep.subr.mxu0 0.0
    %174 = vmatpush2.msra.mxu0 0.0
    %175 = vmatprep.subr.mxu0 0.0
    %176 = vmatpush2.msra.mxu0 0.0
    %177 = vmatprep.subr.mxu0 0.0
    %178 = vmatpush2.msra.mxu0 0.0
    %179 = vmatprep.subr.mxu0 0.0
    %180 = vmatpush2.msra.mxu0 0.0
    %181 = vmatprep.subr.mxu0 0.0
    %182 = vmatpush2.msra.mxu0 0.0
    %183 = vmatprep.subr.mxu0 0.0
    %184 = vmatpush2.msra.mxu0 0.0
    %185 = vmatprep.subr.mxu0 0.0
    %186 = vmatpush2.msra.mxu0 0.0
    %187 = vmatprep.subr.mxu0 0.0
    %188 = vmatpush2.msra.mxu0 0.0
    %189 = vmatprep.subr.mxu0 0.0
    %190 = vmatpush2.msra.mxu0 0.0
    %191 = vmatprep.subr.mxu0 0.0
    %192 = vmatpush2.msra.mxu0 0.0
    %193 = vmatprep.subr.mxu0 0.0
    %194 = vmatpush2.msra.mxu0 0.0
    %195 = vmatprep.subr.mxu0 0.0
    %196 = vmatpush2.msra.mxu0 0.0
    %197 = vmatprep.subr.mxu0 0.0
    %198 = vmatpush2.msra.mxu0 0.0
    %199 = vmatprep.subr.mxu0 0.0
    %200 = vmatpush2.msra.mxu0 0.0
    %201 = vmatprep.subr.mxu0 0.0
    %202 = vmatpush2.msra.mxu0 0.0
    %203 = vmatprep.subr.mxu0 0.0
    %204 = vmatpush2.msra.mxu0 0.0
    %205 = vmatprep.mubr.f32.mxu0 0.0
    %206 = vmatmul.mubr.f32.gmra.mxu0 %v55
    %v207 = vpop.f32.mrf.mxu0
    %v208 = vadd.f32 0.0, %v207
    %v209 = vpop.f32.mrf.mxu0
    %v210 = vadd.f32 0.0, %v209
    %211 = vdwg.mxu0
    %v212 = vadd.f32 %v137, %v139
    %v213 = vadd.f32 %v212, %v208
    %v214 = vadd.f32 %v213, %v210
    %215 = vadd.xlane.f32.xlu0 %v214
    %v216 = vpop.xlane.xlu0 %215
    %v217 = vmul.f32 %v216, 0.001953125
    %v218 = vsub.f32 %v137, %v217
    %v219 = vsub.f32 %v139, %v217
    %v220 = vsub.f32 %v208, %v217
    %v221 = vsub.f32 %v210, %v217
    %v222 = vmul.f32 %v218, %v218
    %v223 = vmul.f32 %v219, %v219
    %v224 = vmul.f32 %v220, %v220
    %v225 = vmul.f32 %v221, %v221
    %v226 = vadd.f32 %v222, %v223
    %v227 = vadd.f32 %v226, %v224
    %v228 = vadd.f32 %v227, %v225
    %229 = vadd.xlane.f32.xlu0 %v228
    %v230 = vpop.xlane.xlu0 %229
    %v231 = vmul.f32 %v230, 0.001953125
    %v232 = vld [vmem:[%s2] sm:$0xff]
    %v233 = vadd.f32 %v231, 1e-05
    %v234 = vrsqrt.pop %v233
    %v235 = vmul.f32 %v232, %v234
    %237 = vset.pattern.permute.xlu0 0
    %238 = vperm.xlu0 %237, %v235
    %v239 = vpop.permute.xlu0 %238
    %v241 = vmul.f32 %v218, %v239
    %v242 = vmul.f32 %v219, %v239
    %v243 = vmul.f32 %v220, %v239
    %v244 = vmul.f32 %v221, %v239
    %v245 = vld [vmem:[%s3] sm:$0xff]
    %247 = vset.pattern.permute.xlu0 0
    %248 = vperm.xlu0 %247, %v245
    %v249 = vpop.permute.xlu0 %248
    %v251 = vadd.f32 %v241, %v249
    %v252 = vadd.f32 %v242, %v249
    %v253 = vadd.f32 %v243, %v249
    %v254 = vadd.f32 %v244, %v249
    %v255 = vmax.f32 %v251, 0.0
    %v256 = vmax.f32 %v252, 0.0
    %v257 = vmax.f32 %v253, 0.0
    %v258 = vmax.f32 %v254, 0.0
    %259 = vst [vmem:[#allocation5] sm:$0xff] %v255
    %260 = vst [vmem:[#allocation5 + $0x8] sm:$0xff] %v256
    %261 = vst [vmem:[#allocation5 + $0x10] sm:$0xff] %v257
    %262 = vst [vmem:[#allocation5 + $0x18] sm:$0xff] %v258
    // Predicated region
    $region22: #{tpu_custom_call.1} parent=1 // pred_check
      _
    $region23: #{tpu_custom_call.1} parent=1 // pred_check_branch
      %264 = sbr.rel (0) target = $region25
    $region24: #{tpu_custom_call.1} parent=1 // pred_region
      %s266 = ssub.s32 512, 512
      %267 = vsyncadd [#allocation4], %s266
      %s269 = sshll.u32 [#allocation5], 4
      %s270 = int_to_ptr.vmem [resolvable:$true] %s269
      %272 = dma.vmem_to_hbm [thread:$0]  %s270, 512, %s4, [#allocation4]
    $region25: #{tpu_custom_call.1} parent=1 // pred_fallthru
      _
    // Predicated region
    $region26: #{tpu_custom_call.1} parent=1 // pred_check
      _
    $region27: #{tpu_custom_call.1} parent=1 // pred_check_branch
      %274 = sbr.rel (0) target = $region29
    $region28: #{tpu_custom_call.1} parent=1 // pred_region
      %275 = dma.done [#allocation4], 512
    $region29: #{tpu_custom_call.1} parent=1 // pred_fallthru
      _
    %276 = vsyncpa [#allocation3], 1
    %277 = vsyncpa [#allocation4], 1

</llo_original>
